<compile_context>
chip_gen: v7x
topology: tpu7x:2x2x1
jax: 0.10.0
libtpu: 0.0.40
codegen_flags: <defaults>
</compile_context>

<pallas_src>
import jax
import jax.numpy as jnp
from jax.experimental import pallas as pl
from jax.experimental.pallas import tpu as pltpu


def rbf_kernel(xa_ref, ca_ref, nss_ref, o_ref):
    # xa_ref : (TN, K)  augmented points  [x, ||x||^2, 1, zero-pad]
    # ca_ref : (K,  F)  augmented centres [-2*C^T ; ones ; ||c||^2 ; zero-pad]
    # nss_ref: (1,  F)  -(sigmas**2)
    # o_ref  : (TN, F)  output block
    dist = jnp.dot(
        xa_ref[...],
        ca_ref[...],
        preferred_element_type=jnp.float32,
        precision=jax.lax.Precision.HIGHEST,  # full-f32 MXU passes; K=8 so cost is negligible
    )  # (TN, F) == sum((x - c)^2)
    # exp(-(dist*sigma)^2) == exp(dist*dist * (-(sigma^2)))
    o_ref[...] = jnp.exp(dist * dist * nss_ref[...]).astype(o_ref.dtype)


def _round_up(a, m):
    return ((a + m - 1) // m) * m


def rbf_layer(x, centres, sigmas, *, tile_n=2048):
    """x: (1, N, D) or (N, D); centres: (F, D); sigmas: (F,). Returns (1, N, F)."""
    x2d = x[0] if x.ndim == 3 else x
    n, d = x2d.shape
    f = centres.shape[0]

    K = 8  # augmented contraction dim (>= d + 2), sublane-friendly
    assert d + 2 <= K, "in_features too large for the K=8 augmented contraction"

    x32 = x2d.astype(jnp.float32)
    c32 = centres.astype(jnp.float32)
    s32 = sigmas.astype(jnp.float32)

    # --- wrapper-side precompute (tiny, amortized) -----------------------------
    x_sq = jnp.sum(x32 * x32, axis=-1, keepdims=True)                     # (N, 1)
    x_aug = jnp.concatenate(
        [x32, x_sq, jnp.ones((n, 1), jnp.float32),
         jnp.zeros((n, K - d - 2), jnp.float32)], axis=-1)                # (N, K)

    c_sq = jnp.sum(c32 * c32, axis=-1)[None, :]                           # (1, F)
    c_aug = jnp.concatenate(
        [-2.0 * c32.T, jnp.ones((1, f), jnp.float32), c_sq,
         jnp.zeros((K - d - 2, f), jnp.float32)], axis=0)                 # (K, F)

    neg_sig_sq = (-(s32 * s32)).reshape(1, f)                             # (1, F)

    # --- tile sizing ------------------------------------------------------------
    n_ceil = _round_up(n, 8)
    tile_n = max(8, min(tile_n, n_ceil))
    # keep at least 2 grid steps when possible so v7x megacore can shard the grid
    if n_ceil >= 16 and pl.cdiv(n_ceil, tile_n) < 2:
        tile_n = _round_up(pl.cdiv(n_ceil, 2), 8)
    n_pad = tile_n * pl.cdiv(n, tile_n)
    if n_pad != n:
        x_aug = jnp.pad(x_aug, ((0, n_pad - n), (0, 0)))  # padded rows are sliced off below

    grid = (n_pad // tile_n,)

    # TODO(synk): if downstream consumers accept bf16, emit the output as bf16 to
    # halve HBM store bytes (dominant traffic on v5e/v6e); kept f32 for parity.
    out = pl.pallas_call(
        rbf_kernel,
        out_shape=jax.ShapeDtypeStruct((n_pad, f), x2d.dtype),
        grid_spec=pltpu.PrefetchScalarGridSpec(
            num_scalar_prefetch=0,
            grid=grid,
            in_specs=[
                pl.BlockSpec((tile_n, K), lambda i: (i, 0)),
                pl.BlockSpec((K, f), lambda i: (0, 0)),
                pl.BlockSpec((1, f), lambda i: (0, 0)),
            ],
            out_specs=pl.BlockSpec((tile_n, f), lambda i: (i, 0)),
        ),
        compiler_params=pltpu.CompilerParams(
            dimension_semantics=("parallel",),
        ),
    )(x_aug, c_aug, neg_sig_sq)

    return out[:n][None, ...]  # (1, N, F)


def _reference(x, centres, sigmas):
    # Pure-JAX reference mirroring the PyTorch forward exactly.
    x2d = x[0] if x.ndim == 3 else x
    diff = x2d[:, None, :] - centres[None, :, :]              # (N, F, D)
    dist = jnp.sum(diff * diff, axis=-1) * sigmas[None, :]    # (N, F)
    return jnp.exp(-(dist ** 2))[None, ...]


if __name__ == "__main__":
    in_features = 3
    out_features = 128
    n_points = 256

    key = jax.random.PRNGKey(0)
    k_x, k_c = jax.random.split(key)

    # Deterministic parameter init matching reset_parameters():
    #   centres ~ U(-1, 1), sigmas = 10, freq = pi (unused in forward).
    centres = jax.random.uniform(
        k_c, (out_features, in_features), dtype=jnp.float32, minval=-1.0, maxval=1.0
    )
    sigmas = jnp.full((out_features,), 10.0, dtype=jnp.float32)
    freq = jnp.full((1, out_features), jnp.pi, dtype=jnp.float32)  # parity only; unused

    # Example input: (1, N, in_features)
    x = jax.random.uniform(
        k_x, (1, n_points, in_features), dtype=jnp.float32, minval=-1.0, maxval=1.0
    )

    out = rbf_layer(x, centres, sigmas)
    out = jax.block_until_ready(out)

    ref = _reference(x, centres, sigmas)
    assert out.shape == (1, n_points, out_features)
    # expanded ||x-c||^2 form can differ by a few ulps from the diff^2 sum
    assert jnp.allclose(out, ref, atol=1e-4, rtol=1e-4), "mismatch vs reference"

    print("KERNEL_OK")
</pallas_src>

<mosaic_0001>
module attributes {stable_mosaic.version = 11 : i64} {
  func.func @rbf_kernel(%arg0: i32, %arg1: memref<128x8xf32, #tpu.memory_space<vmem>>, %arg2: memref<8x128xf32, #tpu.memory_space<vmem>>, %arg3: memref<1x128xf32, #tpu.memory_space<vmem>>, %arg4: memref<128x128xf32, #tpu.memory_space<vmem>>) attributes {dimension_semantics = [#tpu.dimension_semantics<parallel>], iteration_bounds = array<i64: 2>, scalar_prefetch = 0 : i64, scratch_operands = 0 : i64, tpu.core_type = #tpu.core_type<tc>, window_params = [{transform_indices = @transform_0, window_bounds = array<i64: 128, 8>}, {pipeline_mode = #tpu.pipeline_mode<synchronous>, transform_indices = @transform_1, window_bounds = array<i64: 8, 128>}, {pipeline_mode = #tpu.pipeline_mode<synchronous>, transform_indices = @transform_2, window_bounds = array<i64: 1, 128>}, {transform_indices = @transform_3, window_bounds = array<i64: 128, 128>}]} {
    %c0 = arith.constant 0 : index
    %c0_0 = arith.constant 0 : index
    %0 = vector.load %arg1[%c0, %c0_0] : memref<128x8xf32, #tpu.memory_space<vmem>>, vector<128x8xf32>
    %c0_1 = arith.constant 0 : index
    %c0_2 = arith.constant 0 : index
    %1 = vector.load %arg2[%c0_1, %c0_2] : memref<8x128xf32, #tpu.memory_space<vmem>>, vector<8x128xf32>
    %cst = arith.constant dense<0.000000e+00> : vector<128x128xf32>
    %2 = tpu.matmul %0, %1, %cst {dimension_numbers = #tpu.dot_dimension_numbers<[1], [0], [0], [1], [0, 0, 1, 1], [], []>, precision = #tpu.contract_precision<fp32>} : vector<128x8xf32>, vector<8x128xf32>, vector<128x128xf32> -> vector<128x128xf32>
    %3 = arith.mulf %2, %2 : vector<128x128xf32>
    %c0_3 = arith.constant 0 : index
    %c0_4 = arith.constant 0 : index
    %4 = vector.load %arg3[%c0_3, %c0_4] : memref<1x128xf32, #tpu.memory_space<vmem>>, vector<1x128xf32>
    %5 = vector.broadcast %4 : vector<1x128xf32> to vector<128x128xf32>
    %6 = arith.mulf %3, %5 : vector<128x128xf32>
    %7 = math.exp %6 : vector<128x128xf32>
    %c0_5 = arith.constant 0 : index
    %c0_6 = arith.constant 0 : index
    %8 = vector.load %arg4[%c0_5, %c0_6] : memref<128x128xf32, #tpu.memory_space<vmem>>, vector<128x128xf32>
    tpu.vector_store %arg4[%c0_5, %c0_6], %7 {strides = array<i32>} : memref<128x128xf32, #tpu.memory_space<vmem>>, vector<128x128xf32>,
    return
  }
  func.func @transform_0(%arg0: i32) -> (i32, i32) {
    %c0_i32 = arith.constant 0 : i32
    %c0_i32_0 = arith.constant 0 : i32
    return %arg0, %c0_i32 : i32, i32
  }
  func.func @transform_1(%arg0: i32) -> (i32, i32) {
    %c0_i32 = arith.constant 0 : i32
    %c0_i32_0 = arith.constant 0 : i32
    %c0_i32_1 = arith.constant 0 : i32
    return %c0_i32, %c0_i32_0 : i32, i32
  }
  func.func @transform_2(%arg0: i32) -> (i32, i32) {
    %c0_i32 = arith.constant 0 : i32
    %c0_i32_0 = arith.constant 0 : i32
    %c0_i32_1 = arith.constant 0 : i32
    return %c0_i32, %c0_i32_0 : i32, i32
  }
  func.func @transform_3(%arg0: i32) -> (i32, i32) {
    %c0_i32 = arith.constant 0 : i32
    %c0_i32_0 = arith.constant 0 : i32
    return %arg0, %c0_i32 : i32, i32
  }
}

</mosaic_0001>

<llo_original>
// kernel: tpu_custom_call.1
$region0: #{tpu_custom_call.1}
  #allocation0 [shape = 'u32[]', space=smem, size = 0x4, offset = 0x4, fixed_abs, tag = 'smem constant byte address 0x4 - core index']
  #allocation1 [shape = 'u32[144,128]{1,0:T(1,128)}', space=vmem, size = 0x12000, scoped, tag = 'internal scratch']
  %s0 = inlined_call_operand.vmem [shape: f32[256,8], index: 0, kind: input, shape index: {}]
  %s1 = inlined_call_operand.vmem [shape: f32[8,128], index: 1, kind: input, shape index: {}]
  %s2 = inlined_call_operand.vmem [shape: f32[1,128], index: 2, kind: input, shape index: {}]
  %s3 = inlined_call_operand.hbm [shape: f32[256,128], index: 3, kind: output, shape index: {}]
  %s4 = sld [smem:[#allocation0]]
  $region45: #{tpu_custom_call.1} parent=0
    _
  %s6 = ssub.s32 1, %s4
  %s7 = scalar_select 0, %s6, %s4
  $region1: #{tpu_custom_call.1} parent=0
    #allocation2 [shape = 'u8[131072]{0}', space=vmem, size = 0x20000, scoped, tag = 'output window, operand 0']
    #allocation3 [shape = 's32[2]{0}', space=sflag, size = 0x8, scoped, tag = 'scoped memory for tpu_custom_call.1']
    %8 = vsyncpa [#allocation3], 0
    %s9 = scalar_lea.sflag [#allocation3], 1
    %10 = vsyncpa %s9, 0
    loop: start=0, step=1, limit=4
    $region2: #{tpu_custom_call.1} parent=1 // loop_pre_header
      _
    $region3: #{tpu_custom_call.1} parent=1 // loop_header
      %s12 = sphi 0, %s16
      %p13 = scmp.ge.s32.totalorder %s12, 4
      %s22 = sphi 0, %s24
      %s25 = sphi 0, %s22
      %s26 = sphi 0, %s25
      %s42 = sphi 0, %s26
      %s46 = sphi 0, %s46
      %s48 = sphi 0, %s46
      %s49 = sphi 0, %s48
      %s63 = sphi 0, %s49
      %s67 = sphi 0, %s67
      %s69 = sphi 0, %s67
      %s70 = sphi 0, %s69
      %s84 = sphi 0, %s70
      %s90 = sphi 0, %s92
      %s93 = sphi 0, %s90
      %s94 = sphi 0, %s93
      %s110 = sphi 0, %s94
    $region4: #{tpu_custom_call.1} parent=1 // loop_header_branch
      %15 = sbr.rel (%p13) target = $region8
    $region5: #{tpu_custom_call.1} parent=1 // loop_body
      %s17 = ssub.s32 %s12, 1
      %s18 = ssub.s32 %s12, 2
      %s19 = sadd.s32 %s12, 1
      %s20 = ssub.s32 %s12, %s19
      %p21 = scmp.eq.s32.totalorder %s20, 0
      %s23 = sadd.s32 %s22, 1
      %s24 = scalar_select %p21, %s22, %s23
      %p27 = pneg %p21
      %p28 = scmp.eq.s32.totalorder %s12, 1
      %p29 = por %p27, %p28
      %p30 = scmp.ne.s32.totalorder %s22, %s25
      %p31 = scmp.eq.s32.totalorder %s12, 0
      %p32 = por %p30, %p31
      %p33 = scmp.ne.s32.totalorder %s22, %s25
      %p34 = scmp.eq.s32.totalorder %s17, 1
      %p35 = por %p33, %p34
      %p36 = scmp.ne.s32.totalorder %s25, %s26
      %p37 = scmp.eq.s32.totalorder %s17, 0
      %p38 = por %p36, %p37
      %p39 = scmp.ne.s32.totalorder %s25, %s26
      %p40 = scmp.eq.s32.totalorder %s18, 1
      %p41 = por %p39, %p40
      %p43 = scmp.ne.s32.totalorder %s26, %s42
      %p44 = scmp.eq.s32.totalorder %s18, 0
      %p45 = por %p43, %p44
      %s47 = sadd.s32 %s46, 1
      %p50 = scmp.eq.s32.totalorder %s12, 1
      %p51 = scmp.ne.s32.totalorder %s46, %s48
      %p52 = scmp.eq.s32.totalorder %s12, 0
      %p53 = por %p51, %p52
      %p54 = scmp.ne.s32.totalorder %s46, %s48
      %p55 = scmp.eq.s32.totalorder %s17, 1
      %p56 = por %p54, %p55
      %p57 = scmp.ne.s32.totalorder %s48, %s49
      %p58 = scmp.eq.s32.totalorder %s17, 0
      %p59 = por %p57, %p58
      %p60 = scmp.ne.s32.totalorder %s48, %s49
      %p61 = scmp.eq.s32.totalorder %s18, 1
      %p62 = por %p60, %p61
      %p64 = scmp.ne.s32.totalorder %s49, %s63
      %p65 = scmp.eq.s32.totalorder %s18, 0
      %p66 = por %p64, %p65
      %s68 = sadd.s32 %s67, 1
      %p71 = scmp.eq.s32.totalorder %s12, 1
      %p72 = scmp.ne.s32.totalorder %s67, %s69
      %p73 = scmp.eq.s32.totalorder %s12, 0
      %p74 = por %p72, %p73
      %p75 = scmp.ne.s32.totalorder %s67, %s69
      %p76 = scmp.eq.s32.totalorder %s17, 1
      %p77 = por %p75, %p76
      %p78 = scmp.ne.s32.totalorder %s69, %s70
      %p79 = scmp.eq.s32.totalorder %s17, 0
      %p80 = por %p78, %p79
      %p81 = scmp.ne.s32.totalorder %s69, %s70
      %p82 = scmp.eq.s32.totalorder %s18, 1
      %p83 = por %p81, %p82
      %p85 = scmp.ne.s32.totalorder %s70, %s84
      %p86 = scmp.eq.s32.totalorder %s18, 0
      %p87 = por %p85, %p86
      %s88 = ssub.s32 %s12, %s19
      %p89 = scmp.eq.s32.totalorder %s88, 0
      %s91 = sadd.s32 %s90, 1
      %s92 = scalar_select %p89, %s90, %s91
      %p95 = pneg %p89
      %p96 = scmp.eq.s32.totalorder %s12, 1
      %p97 = por %p95, %p96
      %p98 = scmp.ne.s32.totalorder %s90, %s93
      %p99 = scmp.eq.s32.totalorder %s12, 0
      %p100 = por %p98, %p99
      %p101 = scmp.ne.s32.totalorder %s90, %s93
      %p102 = scmp.eq.s32.totalorder %s17, 1
      %p103 = por %p101, %p102
      %p104 = scmp.ne.s32.totalorder %s93, %s94
      %p105 = scmp.eq.s32.totalorder %s17, 0
      %p106 = por %p104, %p105
      %p107 = scmp.ne.s32.totalorder %s93, %s94
      %p108 = scmp.eq.s32.totalorder %s18, 1
      %p109 = por %p107, %p108
      %p111 = scmp.ne.s32.totalorder %s94, %s110
      %p112 = scmp.eq.s32.totalorder %s18, 0
      %p113 = por %p111, %p112
      %p114 = scmp.le.s32.totalorder 1, %s12
      %p115 = scmp.lt.s32.totalorder %s12, 3
      %p116 = pnand %p114, %p115
      %p117 = pneg %p116
      // Predicated region
      $region9: #{tpu_custom_call.1} parent=5 // pred_check
        _
      $region10: #{tpu_custom_call.1} parent=5 // pred_check_branch
        %119 = sbr.rel (%p116) target = $region12
      $region11: #{tpu_custom_call.1} parent=5 // pred_region
        %s120 = ssub.s32 %s12, 1
        // Predicated region
        $region13: #{tpu_custom_call.1} parent=11 // pred_check
          %p121 = pneg %p59
        $region14: #{tpu_custom_call.1} parent=11 // pred_check_branch
          %123 = sbr.rel (%p121) target = $region16
        $region15: #{tpu_custom_call.1} parent=11 // pred_region
          _
        $region16: #{tpu_custom_call.1} parent=11 // pred_fallthru
          _
        // Predicated region
        $region17: #{tpu_custom_call.1} parent=11 // pred_check
          %p124 = pneg %p80
        $region18: #{tpu_custom_call.1} parent=11 // pred_check_branch
          %126 = sbr.rel (%p124) target = $region20
        $region19: #{tpu_custom_call.1} parent=11 // pred_region
          _
        $region20: #{tpu_custom_call.1} parent=11 // pred_fallthru
          _
      $region12: #{tpu_custom_call.1} parent=5 // pred_fallthru
        _
      %p127 = scmp.lt.s32.totalorder %s12, 2
      // Predicated region
      $region21: #{tpu_custom_call.1} parent=5 // pred_check
        %p128 = pneg %p127
      $region22: #{tpu_custom_call.1} parent=5 // pred_check_branch
        %130 = sbr.rel (%p128) target = $region24
      $region23: #{tpu_custom_call.1} parent=5 // pred_region
        // Predicated region
        $region25: #{tpu_custom_call.1} parent=23 // pred_check
          %p131 = pneg %p32
        $region26: #{tpu_custom_call.1} parent=23 // pred_check_branch
          %133 = sbr.rel (%p131) target = $region28
        $region27: #{tpu_custom_call.1} parent=23 // pred_region
          %s134 = smul.u32 16, %s12
          %p135 = scmp.lt.s32.totalorder %s134, 31
          %s136 = scalar_select %p135, %s134, 31
          %s137 = smul.addr %s136, 8
          %s138 = scalar_lea.vmem %s0, %s137
          %s139 = smul.u32 16, %s12
        $region28: #{tpu_custom_call.1} parent=23 // pred_fallthru
          _
      $region24: #{tpu_custom_call.1} parent=5 // pred_fallthru
        _
      %p140 = scmp.le.s32.totalorder 1, %s12
      %p141 = scmp.lt.s32.totalorder %s12, 3
      %p142 = pnand %p140, %p141
      %p143 = pneg %p142
      // Predicated region
      $region29: #{tpu_custom_call.1} parent=5 // pred_check
        _
      $region30: #{tpu_custom_call.1} parent=5 // pred_check_branch
        %145 = sbr.rel (%p142) target = $region32
      $region31: #{tpu_custom_call.1} parent=5 // pred_region
        %s146 = ssub.s32 %s12, 1
        %s147 = smul.u32 16, %s17
        %p148 = scmp.lt.s32.totalorder %s147, 31
        %s149 = scalar_select %p148, %s147, 31
        %s150 = smul.addr %s149, 8
        %s151 = scalar_lea.vmem %s0, %s150
        %p152 = pneg %p38
        %p153 = pneg %p35
        %p154 = pneg %p59
        %p155 = pneg %p56
        %p156 = pneg %p80
        %p157 = pneg %p77
        %p158 = pneg %p106
        %p159 = pneg %p103
        %s160 = sand.u32 %s93, 1
        %s161 = scalar_lea.sflag [#allocation3], %s160
        %s162 = sand.u32 %s93, 1
        %s163 = smul.addr %s162, 128
        %s164 = scalar_lea.vmem [#allocation2], %s163
        %s165 = smul.u32 16, %s17
        %p166 = scmp.lt.s32.totalorder %s165, 31
        %s167 = scalar_select %p166, %s165, 31
        %s168 = smul.addr %s167, 8
        %s169 = scalar_lea.vmem %s0, %s168
        %s170 = smul.u32 16, %s17
        %s171 = smul.u32 16, %s17
        %v172 = vld [vmem:[%s169] sm:$0xff]
        %v173 = vld [vmem:[%s169 + $0x8] sm:$0xff]
        %v174 = vld [vmem:[%s169 + $0x10] sm:$0xff]
        %v175 = vld [vmem:[%s169 + $0x18] sm:$0xff]
        %v176 = vld [vmem:[%s169 + $0x20] sm:$0xff]
        %v177 = vld [vmem:[%s169 + $0x28] sm:$0xff]
        %v178 = vld [vmem:[%s169 + $0x30] sm:$0xff]
        %v179 = vld [vmem:[%s169 + $0x38] sm:$0xff]
        %v180 = vld [vmem:[%s169 + $0x40] sm:$0xff]
        %v181 = vld [vmem:[%s169 + $0x48] sm:$0xff]
        %v182 = vld [vmem:[%s169 + $0x50] sm:$0xff]
        %v183 = vld [vmem:[%s169 + $0x58] sm:$0xff]
        %v184 = vld [vmem:[%s169 + $0x60] sm:$0xff]
        %v185 = vld [vmem:[%s169 + $0x68] sm:$0xff]
        %v186 = vld [vmem:[%s169 + $0x70] sm:$0xff]
        %v187 = vld [vmem:[%s169 + $0x78] sm:$0xff]
        %v188 = vld [vmem:[%s1] sm:$0xff]
        %vm189 = vcmask 64512
        %v191 = vsel %vm189, %v172, 0
        %v194 = vsel %vm189, %v173, 0
        %v197 = vsel %vm189, %v174, 0
        %v200 = vsel %vm189, %v175, 0
        %v203 = vsel %vm189, %v176, 0
        %v206 = vsel %vm189, %v177, 0
        %v209 = vsel %vm189, %v178, 0
        %v212 = vsel %vm189, %v179, 0
        %v215 = vsel %vm189, %v180, 0
        %v218 = vsel %vm189, %v181, 0
        %v221 = vsel %vm189, %v182, 0
        %v224 = vsel %vm189, %v183, 0
        %v227 = vsel %vm189, %v184, 0
        %v230 = vsel %vm189, %v185, 0
        %v233 = vsel %vm189, %v186, 0
        %v236 = vsel %vm189, %v187, 0
        %238 = vmatprep.subr.mxu0 0.0
        %v239 = vand.u32 %v188, 4294901760
        %240 = vmatpush1.msra.mxu0 %v239
        %241 = vmatprep.subr.mxu0 0.0
        %242 = vmatpush1.msra.mxu0 0.0
        %243 = vmatprep.subr.mxu0 0.0
        %244 = vmatpush1.msra.mxu0 0.0
        %245 = vmatprep.subr.mxu0 0.0
        %246 = vmatpush1.msra.mxu0 0.0
        %247 = vmatprep.subr.mxu0 0.0
        %248 = vmatpush1.msra.mxu0 0.0
        %249 = vmatprep.subr.mxu0 0.0
        %250 = vmatpush1.msra.mxu0 0.0
        %251 = vmatprep.subr.mxu0 0.0
        %252 = vmatpush1.msra.mxu0 0.0
        %253 = vmatprep.subr.mxu0 0.0
        %254 = vmatpush1.msra.mxu0 0.0
        %255 = vmatprep.subr.mxu0 0.0
        %256 = vmatpush1.msra.mxu0 0.0
        %257 = vmatprep.subr.mxu0 0.0
        %258 = vmatpush1.msra.mxu0 0.0
        %259 = vmatprep.subr.mxu0 0.0
        %260 = vmatpush1.msra.mxu0 0.0
        %261 = vmatprep.subr.mxu0 0.0
        %262 = vmatpush1.msra.mxu0 0.0
        %263 = vmatprep.subr.mxu0 0.0
        %264 = vmatpush1.msra.mxu0 0.0
        %265 = vmatprep.subr.mxu0 0.0
        %266 = vmatpush1.msra.mxu0 0.0
        %267 = vmatprep.subr.mxu0 0.0
        %268 = vmatpush1.msra.mxu0 0.0
        %269 = vmatprep.subr.mxu0 0.0
        %270 = vmatpush1.msra.mxu0 0.0
        %271 = vmatprep.subr.mxu0 0.0
        %272 = vmatpush1.msra.mxu0 0.0
        %273 = vmatprep.subr.mxu0 0.0
        %274 = vmatpush1.msra.mxu0 0.0
        %275 = vmatprep.subr.mxu0 0.0
        %276 = vmatpush1.msra.mxu0 0.0
        %277 = vmatprep.subr.mxu0 0.0
        %278 = vmatpush1.msra.mxu0 0.0
        %279 = vmatprep.subr.mxu0 0.0
        %280 = vmatpush1.msra.mxu0 0.0
        %281 = vmatprep.subr.mxu0 0.0
        %282 = vmatpush1.msra.mxu0 0.0
        %283 = vmatprep.subr.mxu0 0.0
        %284 = vmatpush1.msra.mxu0 0.0
        %285 = vmatprep.subr.mxu0 0.0
        %286 = vmatpush1.msra.mxu0 0.0
        %287 = vmatprep.subr.mxu0 0.0
        %288 = vmatpush1.msra.mxu0 0.0
        %289 = vmatprep.subr.mxu0 0.0
        %290 = vmatpush1.msra.mxu0 0.0
        %291 = vmatprep.subr.mxu0 0.0
        %292 = vmatpush1.msra.mxu0 0.0
        %293 = vmatprep.subr.mxu0 0.0
        %294 = vmatpush1.msra.mxu0 0.0
        %295 = vmatprep.subr.mxu0 0.0
        %296 = vmatpush1.msra.mxu0 0.0
        %297 = vmatprep.subr.mxu0 0.0
        %298 = vmatpush1.msra.mxu0 0.0
        %299 = vmatprep.subr.mxu0 0.0
        %300 = vmatpush1.msra.mxu0 0.0
        %301 = vmatprep.subr.mxu0 0.0
        %302 = vmatpush1.msra.mxu0 0.0
        %303 = vmatprep.mubr.f32.mxu0 0.0
        %v304 = vand.u32 %v191, 4294901760
        %v305 = vsub.f32 %v191, %v304
        %v306 = vand.u32 %v305, 4294901760
        %v307 = vsub.f32 %v305, %v306
        %v308 = vand.u32 %v307, 4294901760
        %309 = vmatmul.mubr.f32.gmra.mrb[0].mxu0 %v308
        %v310 = vpop.f32.mrb[0].mxu0
        %v311 = vadd.f32 0.0, %v310
        %v312 = vpop.f32.mrb[0].mxu0
        %313 = vmatprep.mubr.f32.mxu0 0.0
        %v314 = vand.u32 %v194, 4294901760
        %v315 = vsub.f32 %v194, %v314
        %v316 = vand.u32 %v315, 4294901760
        %v317 = vsub.f32 %v315, %v316
        %v318 = vand.u32 %v317, 4294901760
        %319 = vmatmul.mubr.f32.gmra.mrb[0].mxu0 %v318
        %v320 = vpop.f32.mrb[0].mxu0
        %v321 = vadd.f32 0.0, %v320
        %v322 = vpop.f32.mrb[0].mxu0
        %323 = vmatprep.mubr.f32.mxu0 0.0
        %v324 = vand.u32 %v197, 4294901760
        %v325 = vsub.f32 %v197, %v324
        %v326 = vand.u32 %v325, 4294901760
        %v327 = vsub.f32 %v325, %v326
        %v328 = vand.u32 %v327, 4294901760
        %329 = vmatmul.mubr.f32.gmra.mrb[0].mxu0 %v328
        %v330 = vpop.f32.mrb[0].mxu0
        %v331 = vadd.f32 0.0, %v330
        %v332 = vpop.f32.mrb[0].mxu0
        %333 = vmatprep.mubr.f32.mxu0 0.0
        %v334 = vand.u32 %v200, 4294901760
        %v335 = vsub.f32 %v200, %v334
        %v336 = vand.u32 %v335, 4294901760
        %v337 = vsub.f32 %v335, %v336
        %v338 = vand.u32 %v337, 4294901760
        %339 = vmatmul.mubr.f32.gmra.mrb[0].mxu0 %v338
        %v340 = vpop.f32.mrb[0].mxu0
        %v341 = vadd.f32 0.0, %v340
        %v342 = vpop.f32.mrb[0].mxu0
        %343 = vmatprep.mubr.f32.mxu0 0.0
        %v344 = vand.u32 %v203, 4294901760
        %v345 = vsub.f32 %v203, %v344
        %v346 = vand.u32 %v345, 4294901760
        %v347 = vsub.f32 %v345, %v346
        %v348 = vand.u32 %v347, 4294901760
        %349 = vmatmul.mubr.f32.gmra.mrb[0].mxu0 %v348
        %v350 = vpop.f32.mrb[0].mxu0
        %v351 = vadd.f32 0.0, %v350
        %v352 = vpop.f32.mrb[0].mxu0
        %353 = vmatprep.mubr.f32.mxu0 0.0
        %v354 = vand.u32 %v206, 4294901760
        %v355 = vsub.f32 %v206, %v354
        %v356 = vand.u32 %v355, 4294901760
        %v357 = vsub.f32 %v355, %v356
        %v358 = vand.u32 %v357, 4294901760
        %359 = vmatmul.mubr.f32.gmra.mrb[0].mxu0 %v358
        %v360 = vpop.f32.mrb[0].mxu0
        %v361 = vadd.f32 0.0, %v360
        %v362 = vpop.f32.mrb[0].mxu0
        %363 = vmatprep.mubr.f32.mxu0 0.0
        %v364 = vand.u32 %v209, 4294901760
        %v365 = vsub.f32 %v209, %v364
        %v366 = vand.u32 %v365, 4294901760
        %v367 = vsub.f32 %v365, %v366
        %v368 = vand.u32 %v367, 4294901760
        %369 = vmatmul.mubr.f32.gmra.mrb[0].mxu0 %v368
        %v370 = vpop.f32.mrb[0].mxu0
        %v371 = vadd.f32 0.0, %v370
        %v372 = vpop.f32.mrb[0].mxu0
        %373 = vmatprep.mubr.f32.mxu0 0.0
        %v374 = vand.u32 %v212, 4294901760
        %v375 = vsub.f32 %v212, %v374
        %v376 = vand.u32 %v375, 4294901760
        %v377 = vsub.f32 %v375, %v376
        %v378 = vand.u32 %v377, 4294901760
        %379 = vmatmul.mubr.f32.gmra.mrb[0].mxu0 %v378
        %v380 = vpop.f32.mrb[0].mxu0
        %v381 = vadd.f32 0.0, %v380
        %v382 = vpop.f32.mrb[0].mxu0
        %383 = vmatprep.mubr.f32.mxu0 0.0
        %v384 = vand.u32 %v215, 4294901760
        %v385 = vsub.f32 %v215, %v384
        %v386 = vand.u32 %v385, 4294901760
        %v387 = vsub.f32 %v385, %v386
        %v388 = vand.u32 %v387, 4294901760
        %389 = vmatmul.mubr.f32.gmra.mrb[0].mxu0 %v388
        %v390 = vpop.f32.mrb[0].mxu0
        %v391 = vadd.f32 0.0, %v390
        %v392 = vpop.f32.mrb[0].mxu0
        %393 = vmatprep.mubr.f32.mxu0 0.0
        %v394 = vand.u32 %v218, 4294901760
        %v395 = vsub.f32 %v218, %v394
        %v396 = vand.u32 %v395, 4294901760
        %v397 = vsub.f32 %v395, %v396
        %v398 = vand.u32 %v397, 4294901760
        %399 = vmatmul.mubr.f32.gmra.mrb[0].mxu0 %v398
        %v400 = vpop.f32.mrb[0].mxu0
        %v401 = vadd.f32 0.0, %v400
        %v402 = vpop.f32.mrb[0].mxu0
        %403 = vmatprep.mubr.f32.mxu0 0.0
        %v404 = vand.u32 %v221, 4294901760
        %v405 = vsub.f32 %v221, %v404
        %v406 = vand.u32 %v405, 4294901760
        %v407 = vsub.f32 %v405, %v406
        %v408 = vand.u32 %v407, 4294901760
        %409 = vmatmul.mubr.f32.gmra.mrb[0].mxu0 %v408
        %v410 = vpop.f32.mrb[0].mxu0
        %v411 = vadd.f32 0.0, %v410
        %v412 = vpop.f32.mrb[0].mxu0
        %413 = vmatprep.mubr.f32.mxu0 0.0
        %v414 = vand.u32 %v224, 4294901760
        %v415 = vsub.f32 %v224, %v414
        %v416 = vand.u32 %v415, 4294901760
        %v417 = vsub.f32 %v415, %v416
        %v418 = vand.u32 %v417, 4294901760
        %419 = vmatmul.mubr.f32.gmra.mrb[0].mxu0 %v418
        %v420 = vpop.f32.mrb[0].mxu0
        %v421 = vadd.f32 0.0, %v420
        %v422 = vpop.f32.mrb[0].mxu0
        %423 = vmatprep.mubr.f32.mxu0 0.0
        %v424 = vand.u32 %v227, 4294901760
        %v425 = vsub.f32 %v227, %v424
        %v426 = vand.u32 %v425, 4294901760
        %v427 = vsub.f32 %v425, %v426
        %v428 = vand.u32 %v427, 4294901760
        %429 = vmatmul.mubr.f32.gmra.mrb[0].mxu0 %v428
        %v430 = vpop.f32.mrb[0].mxu0
        %v431 = vadd.f32 0.0, %v430
        %v432 = vpop.f32.mrb[0].mxu0
        %433 = vmatprep.mubr.f32.mxu0 0.0
        %v434 = vand.u32 %v230, 4294901760
        %v435 = vsub.f32 %v230, %v434
        %v436 = vand.u32 %v435, 4294901760
        %v437 = vsub.f32 %v435, %v436
        %v438 = vand.u32 %v437, 4294901760
        %439 = vmatmul.mubr.f32.gmra.mrb[0].mxu0 %v438
        %v440 = vpop.f32.mrb[0].mxu0
        %v441 = vadd.f32 0.0, %v440
        %v442 = vpop.f32.mrb[0].mxu0
        %443 = vmatprep.mubr.f32.mxu0 0.0
        %v444 = vand.u32 %v233, 4294901760
        %v445 = vsub.f32 %v233, %v444
        %v446 = vand.u32 %v445, 4294901760
        %v447 = vsub.f32 %v445, %v446
        %v448 = vand.u32 %v447, 4294901760
        %449 = vmatmul.mubr.f32.gmra.mrb[0].mxu0 %v448
        %v450 = vpop.f32.mrb[0].mxu0
        %v451 = vadd.f32 0.0, %v450
        %v452 = vpop.f32.mrb[0].mxu0
        %453 = vmatprep.mubr.f32.mxu0 0.0
        %v454 = vand.u32 %v236, 4294901760
        %v455 = vsub.f32 %v236, %v454
        %v456 = vand.u32 %v455, 4294901760
        %v457 = vsub.f32 %v455, %v456
        %v458 = vand.u32 %v457, 4294901760
        %459 = vmatmul.mubr.f32.gmra.mrb[0].mxu0 %v458
        %v460 = vpop.f32.mrb[0].mxu0
        %v461 = vadd.f32 0.0, %v460
        %v462 = vpop.f32.mrb[0].mxu0
        %463 = vdwg.mxu0
        %464 = vmatprep.subr.mxu0 0.0
        %v465 = vand.u32 %v188, 4294901760
        %v466 = vsub.f32 %v188, %v465
        %v467 = vand.u32 %v466, 4294901760
        %v468 = vsub.f32 %v466, %v467
        %v469 = vand.u32 %v468, 4294901760
        %470 = vmatpush1.msra.mxu0 %v469
        %471 = vmatprep.subr.mxu0 0.0
        %472 = vmatpush1.msra.mxu0 0.0
        %473 = vmatprep.subr.mxu0 0.0
        %474 = vmatpush1.msra.mxu0 0.0
        %475 = vmatprep.subr.mxu0 0.0
        %476 = vmatpush1.msra.mxu0 0.0
        %477 = vmatprep.subr.mxu0 0.0
        %478 = vmatpush1.msra.mxu0 0.0
        %479 = vmatprep.subr.mxu0 0.0
        %480 = vmatpush1.msra.mxu0 0.0
        %481 = vmatprep.subr.mxu0 0.0
        %482 = vmatpush1.msra.mxu0 0.0
        %483 = vmatprep.subr.mxu0 0.0
        %484 = vmatpush1.msra.mxu0 0.0
        %485 = vmatprep.subr.mxu0 0.0
        %486 = vmatpush1.msra.mxu0 0.0
        %487 = vmatprep.subr.mxu0 0.0
        %488 = vmatpush1.msra.mxu0 0.0
        %489 = vmatprep.subr.mxu0 0.0
        %490 = vmatpush1.msra.mxu0 0.0
        %491 = vmatprep.subr.mxu0 0.0
        %492 = vmatpush1.msra.mxu0 0.0
        %493 = vmatprep.subr.mxu0 0.0
        %494 = vmatpush1.msra.mxu0 0.0
        %495 = vmatprep.subr.mxu0 0.0
        %496 = vmatpush1.msra.mxu0 0.0
        %497 = vmatprep.subr.mxu0 0.0
        %498 = vmatpush1.msra.mxu0 0.0
        %499 = vmatprep.subr.mxu0 0.0
        %500 = vmatpush1.msra.mxu0 0.0
        %501 = vmatprep.subr.mxu0 0.0
        %502 = vmatpush1.msra.mxu0 0.0
        %503 = vmatprep.subr.mxu0 0.0
        %504 = vmatpush1.msra.mxu0 0.0
        %505 = vmatprep.subr.mxu0 0.0
        %506 = vmatpush1.msra.mxu0 0.0
        %507 = vmatprep.subr.mxu0 0.0
        %508 = vmatpush1.msra.mxu0 0.0
        %509 = vmatprep.subr.mxu0 0.0
        %510 = vmatpush1.msra.mxu0 0.0
        %511 = vmatprep.subr.mxu0 0.0
        %512 = vmatpush1.msra.mxu0 0.0
        %513 = vmatprep.subr.mxu0 0.0
        %514 = vmatpush1.msra.mxu0 0.0
        %515 = vmatprep.subr.mxu0 0.0
        %516 = vmatpush1.msra.mxu0 0.0
        %517 = vmatprep.subr.mxu0 0.0
        %518 = vmatpush1.msra.mxu0 0.0
        %519 = vmatprep.subr.mxu0 0.0
        %520 = vmatpush1.msra.mxu0 0.0
        %521 = vmatprep.subr.mxu0 0.0
        %522 = vmatpush1.msra.mxu0 0.0
        %523 = vmatprep.subr.mxu0 0.0
        %524 = vmatpush1.msra.mxu0 0.0
        %525 = vmatprep.subr.mxu0 0.0
        %526 = vmatpush1.msra.mxu0 0.0
        %527 = vmatprep.subr.mxu0 0.0
        %528 = vmatpush1.msra.mxu0 0.0
        %529 = vmatprep.subr.mxu0 0.0
        %530 = vmatpush1.msra.mxu0 0.0
        %531 = vmatprep.subr.mxu0 0.0
        %532 = vmatpush1.msra.mxu0 0.0
        %533 = vmatprep.mubr.f32.mxu0 0.0
        %v534 = vand.u32 %v191, 4294901760
        %535 = vmatmul.mubr.f32.gmra.mrb[0].mxu0 %v534
        %v536 = vpop.f32.mrb[0].mxu0
        %v537 = vadd.f32 %v311, %v536
        %v538 = vpop.f32.mrb[0].mxu0
        %539 = vmatprep.mubr.f32.mxu0 0.0
        %v540 = vand.u32 %v194, 4294901760
        %541 = vmatmul.mubr.f32.gmra.mrb[0].mxu0 %v540
        %v542 = vpop.f32.mrb[0].mxu0
        %v543 = vadd.f32 %v321, %v542
        %v544 = vpop.f32.mrb[0].mxu0
        %545 = vmatprep.mubr.f32.mxu0 0.0
        %v546 = vand.u32 %v197, 4294901760
        %547 = vmatmul.mubr.f32.gmra.mrb[0].mxu0 %v546
        %v548 = vpop.f32.mrb[0].mxu0
        %v549 = vadd.f32 %v331, %v548
        %v550 = vpop.f32.mrb[0].mxu0
        %551 = vmatprep.mubr.f32.mxu0 0.0
        %v552 = vand.u32 %v200, 4294901760
        %553 = vmatmul.mubr.f32.gmra.mrb[0].mxu0 %v552
        %v554 = vpop.f32.mrb[0].mxu0
        %v555 = vadd.f32 %v341, %v554
        %v556 = vpop.f32.mrb[0].mxu0
        %557 = vmatprep.mubr.f32.mxu0 0.0
        %v558 = vand.u32 %v203, 4294901760
        %559 = vmatmul.mubr.f32.gmra.mrb[0].mxu0 %v558
        %v560 = vpop.f32.mrb[0].mxu0
        %v561 = vadd.f32 %v351, %v560
        %v562 = vpop.f32.mrb[0].mxu0
        %563 = vmatprep.mubr.f32.mxu0 0.0
        %v564 = vand.u32 %v206, 4294901760
        %565 = vmatmul.mubr.f32.gmra.mrb[0].mxu0 %v564
        %v566 = vpop.f32.mrb[0].mxu0
        %v567 = vadd.f32 %v361, %v566
        %v568 = vpop.f32.mrb[0].mxu0
        %569 = vmatprep.mubr.f32.mxu0 0.0
        %v570 = vand.u32 %v209, 4294901760
        %571 = vmatmul.mubr.f32.gmra.mrb[0].mxu0 %v570
        %v572 = vpop.f32.mrb[0].mxu0
        %v573 = vadd.f32 %v371, %v572
        %v574 = vpop.f32.mrb[0].mxu0
        %575 = vmatprep.mubr.f32.mxu0 0.0
        %v576 = vand.u32 %v212, 4294901760
        %577 = vmatmul.mubr.f32.gmra.mrb[0].mxu0 %v576
        %v578 = vpop.f32.mrb[0].mxu0
        %v579 = vadd.f32 %v381, %v578
        %v580 = vpop.f32.mrb[0].mxu0
        %581 = vmatprep.mubr.f32.mxu0 0.0
        %v582 = vand.u32 %v215, 4294901760
        %583 = vmatmul.mubr.f32.gmra.mrb[0].mxu0 %v582
        %v584 = vpop.f32.mrb[0].mxu0
        %v585 = vadd.f32 %v391, %v584
        %v586 = vpop.f32.mrb[0].mxu0
        %587 = vmatprep.mubr.f32.mxu0 0.0
        %v588 = vand.u32 %v218, 4294901760
        %589 = vmatmul.mubr.f32.gmra.mrb[0].mxu0 %v588
        %v590 = vpop.f32.mrb[0].mxu0
        %v591 = vadd.f32 %v401, %v590
        %v592 = vpop.f32.mrb[0].mxu0
        %593 = vmatprep.mubr.f32.mxu0 0.0
        %v594 = vand.u32 %v221, 4294901760
        %595 = vmatmul.mubr.f32.gmra.mrb[0].mxu0 %v594
        %v596 = vpop.f32.mrb[0].mxu0
        %v597 = vadd.f32 %v411, %v596
        %v598 = vpop.f32.mrb[0].mxu0
        %599 = vmatprep.mubr.f32.mxu0 0.0
        %v600 = vand.u32 %v224, 4294901760
        %601 = vmatmul.mubr.f32.gmra.mrb[0].mxu0 %v600
        %v602 = vpop.f32.mrb[0].mxu0
        %v603 = vadd.f32 %v421, %v602
        %v604 = vpop.f32.mrb[0].mxu0
        %605 = vmatprep.mubr.f32.mxu0 0.0
        %v606 = vand.u32 %v227, 4294901760
        %607 = vmatmul.mubr.f32.gmra.mrb[0].mxu0 %v606
        %v608 = vpop.f32.mrb[0].mxu0
        %v609 = vadd.f32 %v431, %v608
        %v610 = vpop.f32.mrb[0].mxu0
        %611 = vmatprep.mubr.f32.mxu0 0.0
        %v612 = vand.u32 %v230, 4294901760
        %613 = vmatmul.mubr.f32.gmra.mrb[0].mxu0 %v612
        %v614 = vpop.f32.mrb[0].mxu0
        %v615 = vadd.f32 %v441, %v614
        %v616 = vpop.f32.mrb[0].mxu0
        %617 = vmatprep.mubr.f32.mxu0 0.0
        %v618 = vand.u32 %v233, 4294901760
        %619 = vmatmul.mubr.f32.gmra.mrb[0].mxu0 %v618
        %v620 = vpop.f32.mrb[0].mxu0
        %v621 = vadd.f32 %v451, %v620
        %v622 = vpop.f32.mrb[0].mxu0
        %623 = vmatprep.mubr.f32.mxu0 0.0
        %v624 = vand.u32 %v236, 4294901760
        %625 = vmatmul.mubr.f32.gmra.mrb[0].mxu0 %v624
        %v626 = vpop.f32.mrb[0].mxu0
        %v627 = vadd.f32 %v461, %v626
        %v628 = vpop.f32.mrb[0].mxu0
        %629 = vdwg.mxu0
        %630 = vmatprep.subr.mxu0 0.0
        %v631 = vand.u32 %v188, 4294901760
        %v632 = vsub.f32 %v188, %v631
        %633 = vmatpush1.msra.mxu0 %v632
        %634 = vmatprep.subr.mxu0 0.0
        %635 = vmatpush1.msra.mxu0 0.0
        %636 = vmatprep.subr.mxu0 0.0
        %637 = vmatpush1.msra.mxu0 0.0
        %638 = vmatprep.subr.mxu0 0.0
        %639 = vmatpush1.msra.mxu0 0.0
        %640 = vmatprep.subr.mxu0 0.0
        %641 = vmatpush1.msra.mxu0 0.0
        %642 = vmatprep.subr.mxu0 0.0
        %643 = vmatpush1.msra.mxu0 0.0
        %644 = vmatprep.subr.mxu0 0.0
        %645 = vmatpush1.msra.mxu0 0.0
        %646 = vmatprep.subr.mxu0 0.0
        %647 = vmatpush1.msra.mxu0 0.0
        %648 = vmatprep.subr.mxu0 0.0
        %649 = vmatpush1.msra.mxu0 0.0
        %650 = vmatprep.subr.mxu0 0.0
        %651 = vmatpush1.msra.mxu0 0.0
        %652 = vmatprep.subr.mxu0 0.0
        %653 = vmatpush1.msra.mxu0 0.0
        %654 = vmatprep.subr.mxu0 0.0
        %655 = vmatpush1.msra.mxu0 0.0
        %656 = vmatprep.subr.mxu0 0.0
        %657 = vmatpush1.msra.mxu0 0.0
        %658 = vmatprep.subr.mxu0 0.0
        %659 = vmatpush1.msra.mxu0 0.0
        %660 = vmatprep.subr.mxu0 0.0
        %661 = vmatpush1.msra.mxu0 0.0
        %662 = vmatprep.subr.mxu0 0.0
        %663 = vmatpush1.msra.mxu0 0.0
        %664 = vmatprep.subr.mxu0 0.0
        %665 = vmatpush1.msra.mxu0 0.0
        %666 = vmatprep.subr.mxu0 0.0
        %667 = vmatpush1.msra.mxu0 0.0
        %668 = vmatprep.subr.mxu0 0.0
        %669 = vmatpush1.msra.mxu0 0.0
        %670 = vmatprep.subr.mxu0 0.0
        %671 = vmatpush1.msra.mxu0 0.0
        %672 = vmatprep.subr.mxu0 0.0
        %673 = vmatpush1.msra.mxu0 0.0
        %674 = vmatprep.subr.mxu0 0.0
        %675 = vmatpush1.msra.mxu0 0.0
        %676 = vmatprep.subr.mxu0 0.0
        %677 = vmatpush1.msra.mxu0 0.0
        %678 = vmatprep.subr.mxu0 0.0
        %679 = vmatpush1.msra.mxu0 0.0
        %680 = vmatprep.subr.mxu0 0.0
        %681 = vmatpush1.msra.mxu0 0.0
        %682 = vmatprep.subr.mxu0 0.0
        %683 = vmatpush1.msra.mxu0 0.0
        %684 = vmatprep.subr.mxu0 0.0
        %685 = vmatpush1.msra.mxu0 0.0
        %686 = vmatprep.subr.mxu0 0.0
        %687 = vmatpush1.msra.mxu0 0.0
        %688 = vmatprep.subr.mxu0 0.0
        %689 = vmatpush1.msra.mxu0 0.0
        %690 = vmatprep.subr.mxu0 0.0
        %691 = vmatpush1.msra.mxu0 0.0
        %692 = vmatprep.subr.mxu0 0.0
        %693 = vmatpush1.msra.mxu0 0.0
        %694 = vmatprep.subr.mxu0 0.0
        %695 = vmatpush1.msra.mxu0 0.0
        %696 = vmatprep.mubr.f32.mxu0 0.0
        %v697 = vand.u32 %v191, 4294901760
        %v698 = vsub.f32 %v191, %v697
        %699 = vmatmul.mubr.f32.gmra.mrb[0].mxu0 %v698
        %v700 = vpop.f32.mrb[0].mxu0
        %v701 = vadd.f32 %v537, %v700
        %v702 = vpop.f32.mrb[0].mxu0
        %703 = vmatprep.mubr.f32.mxu0 0.0
        %v704 = vand.u32 %v194, 4294901760
        %v705 = vsub.f32 %v194, %v704
        %706 = vmatmul.mubr.f32.gmra.mrb[0].mxu0 %v705
        %v707 = vpop.f32.mrb[0].mxu0
        %v708 = vadd.f32 %v543, %v707
        %v709 = vpop.f32.mrb[0].mxu0
        %710 = vmatprep.mubr.f32.mxu0 0.0
        %v711 = vand.u32 %v197, 4294901760
        %v712 = vsub.f32 %v197, %v711
        %713 = vmatmul.mubr.f32.gmra.mrb[0].mxu0 %v712
        %v714 = vpop.f32.mrb[0].mxu0
        %v715 = vadd.f32 %v549, %v714
        %v716 = vpop.f32.mrb[0].mxu0
        %717 = vmatprep.mubr.f32.mxu0 0.0
        %v718 = vand.u32 %v200, 4294901760
        %v719 = vsub.f32 %v200, %v718
        %720 = vmatmul.mubr.f32.gmra.mrb[0].mxu0 %v719
        %v721 = vpop.f32.mrb[0].mxu0
        %v722 = vadd.f32 %v555, %v721
        %v723 = vpop.f32.mrb[0].mxu0
        %724 = vmatprep.mubr.f32.mxu0 0.0
        %v725 = vand.u32 %v203, 4294901760
        %v726 = vsub.f32 %v203, %v725
        %727 = vmatmul.mubr.f32.gmra.mrb[0].mxu0 %v726
        %v728 = vpop.f32.mrb[0].mxu0
        %v729 = vadd.f32 %v561, %v728
        %v730 = vpop.f32.mrb[0].mxu0
        %731 = vmatprep.mubr.f32.mxu0 0.0
        %v732 = vand.u32 %v206, 4294901760
        %v733 = vsub.f32 %v206, %v732
        %734 = vmatmul.mubr.f32.gmra.mrb[0].mxu0 %v733
        %v735 = vpop.f32.mrb[0].mxu0
        %v736 = vadd.f32 %v567, %v735
        %v737 = vpop.f32.mrb[0].mxu0
        %738 = vmatprep.mubr.f32.mxu0 0.0
        %v739 = vand.u32 %v209, 4294901760
        %v740 = vsub.f32 %v209, %v739
        %741 = vmatmul.mubr.f32.gmra.mrb[0].mxu0 %v740
        %v742 = vpop.f32.mrb[0].mxu0
        %v743 = vadd.f32 %v573, %v742
        %v744 = vpop.f32.mrb[0].mxu0
        %745 = vmatprep.mubr.f32.mxu0 0.0
        %v746 = vand.u32 %v212, 4294901760
        %v747 = vsub.f32 %v212, %v746
        %748 = vmatmul.mubr.f32.gmra.mrb[0].mxu0 %v747
        %v749 = vpop.f32.mrb[0].mxu0
        %v750 = vadd.f32 %v579, %v749
        %v751 = vpop.f32.mrb[0].mxu0
        %752 = vmatprep.mubr.f32.mxu0 0.0
        %v753 = vand.u32 %v215, 4294901760
        %v754 = vsub.f32 %v215, %v753
        %755 = vmatmul.mubr.f32.gmra.mrb[0].mxu0 %v754
        %v756 = vpop.f32.mrb[0].mxu0
        %v757 = vadd.f32 %v585, %v756
        %v758 = vpop.f32.mrb[0].mxu0
        %759 = vmatprep.mubr.f32.mxu0 0.0
        %v760 = vand.u32 %v218, 4294901760
        %v761 = vsub.f32 %v218, %v760
        %762 = vmatmul.mubr.f32.gmra.mrb[0].mxu0 %v761
        %v763 = vpop.f32.mrb[0].mxu0
        %v764 = vadd.f32 %v591, %v763
        %v765 = vpop.f32.mrb[0].mxu0
        %766 = vmatprep.mubr.f32.mxu0 0.0
        %v767 = vand.u32 %v221, 4294901760
        %v768 = vsub.f32 %v221, %v767
        %769 = vmatmul.mubr.f32.gmra.mrb[0].mxu0 %v768
        %v770 = vpop.f32.mrb[0].mxu0
        %v771 = vadd.f32 %v597, %v770
        %v772 = vpop.f32.mrb[0].mxu0
        %773 = vmatprep.mubr.f32.mxu0 0.0
        %v774 = vand.u32 %v224, 4294901760
        %v775 = vsub.f32 %v224, %v774
        %776 = vmatmul.mubr.f32.gmra.mrb[0].mxu0 %v775
        %v777 = vpop.f32.mrb[0].mxu0
        %v778 = vadd.f32 %v603, %v777
        %v779 = vpop.f32.mrb[0].mxu0
        %780 = vmatprep.mubr.f32.mxu0 0.0
        %v781 = vand.u32 %v227, 4294901760
        %v782 = vsub.f32 %v227, %v781
        %783 = vmatmul.mubr.f32.gmra.mrb[0].mxu0 %v782
        %v784 = vpop.f32.mrb[0].mxu0
        %v785 = vadd.f32 %v609, %v784
        %v786 = vpop.f32.mrb[0].mxu0
        %787 = vmatprep.mubr.f32.mxu0 0.0
        %v788 = vand.u32 %v230, 4294901760
        %v789 = vsub.f32 %v230, %v788
        %790 = vmatmul.mubr.f32.gmra.mrb[0].mxu0 %v789
        %v791 = vpop.f32.mrb[0].mxu0
        %v792 = vadd.f32 %v615, %v791
        %v793 = vpop.f32.mrb[0].mxu0
        %794 = vmatprep.mubr.f32.mxu0 0.0
        %v795 = vand.u32 %v233, 4294901760
        %v796 = vsub.f32 %v233, %v795
        %797 = vmatmul.mubr.f32.gmra.mrb[0].mxu0 %v796
        %v798 = vpop.f32.mrb[0].mxu0
        %v799 = vadd.f32 %v621, %v798
        %v800 = vpop.f32.mrb[0].mxu0
        %801 = vmatprep.mubr.f32.mxu0 0.0
        %v802 = vand.u32 %v236, 4294901760
        %v803 = vsub.f32 %v236, %v802
        %804 = vmatmul.mubr.f32.gmra.mrb[0].mxu0 %v803
        %v805 = vpop.f32.mrb[0].mxu0
        %v806 = vadd.f32 %v627, %v805
        %v807 = vpop.f32.mrb[0].mxu0
        %808 = vdwg.mxu0
        %809 = vmatprep.subr.mxu0 0.0
        %v810 = vand.u32 %v188, 4294901760
        %811 = vmatpush1.msra.mxu0 %v810
        %812 = vmatprep.subr.mxu0 0.0
        %813 = vmatpush1.msra.mxu0 0.0
        %814 = vmatprep.subr.mxu0 0.0
        %815 = vmatpush1.msra.mxu0 0.0
        %816 = vmatprep.subr.mxu0 0.0
        %817 = vmatpush1.msra.mxu0 0.0
        %818 = vmatprep.subr.mxu0 0.0
        %819 = vmatpush1.msra.mxu0 0.0
        %820 = vmatprep.subr.mxu0 0.0
        %821 = vmatpush1.msra.mxu0 0.0
        %822 = vmatprep.subr.mxu0 0.0
        %823 = vmatpush1.msra.mxu0 0.0
        %824 = vmatprep.subr.mxu0 0.0
        %825 = vmatpush1.msra.mxu0 0.0
        %826 = vmatprep.subr.mxu0 0.0
        %827 = vmatpush1.msra.mxu0 0.0
        %828 = vmatprep.subr.mxu0 0.0
        %829 = vmatpush1.msra.mxu0 0.0
        %830 = vmatprep.subr.mxu0 0.0
        %831 = vmatpush1.msra.mxu0 0.0
        %832 = vmatprep.subr.mxu0 0.0
        %833 = vmatpush1.msra.mxu0 0.0
        %834 = vmatprep.subr.mxu0 0.0
        %835 = vmatpush1.msra.mxu0 0.0
        %836 = vmatprep.subr.mxu0 0.0
        %837 = vmatpush1.msra.mxu0 0.0
        %838 = vmatprep.subr.mxu0 0.0
        %839 = vmatpush1.msra.mxu0 0.0
        %840 = vmatprep.subr.mxu0 0.0
        %841 = vmatpush1.msra.mxu0 0.0
        %842 = vmatprep.subr.mxu0 0.0
        %843 = vmatpush1.msra.mxu0 0.0
        %844 = vmatprep.subr.mxu0 0.0
        %845 = vmatpush1.msra.mxu0 0.0
        %846 = vmatprep.subr.mxu0 0.0
        %847 = vmatpush1.msra.mxu0 0.0
        %848 = vmatprep.subr.mxu0 0.0
        %849 = vmatpush1.msra.mxu0 0.0
        %850 = vmatprep.subr.mxu0 0.0
        %851 = vmatpush1.msra.mxu0 0.0
        %852 = vmatprep.subr.mxu0 0.0
        %853 = vmatpush1.msra.mxu0 0.0
        %854 = vmatprep.subr.mxu0 0.0
        %855 = vmatpush1.msra.mxu0 0.0
        %856 = vmatprep.subr.mxu0 0.0
        %857 = vmatpush1.msra.mxu0 0.0
        %858 = vmatprep.subr.mxu0 0.0
        %859 = vmatpush1.msra.mxu0 0.0
        %860 = vmatprep.subr.mxu0 0.0
        %861 = vmatpush1.msra.mxu0 0.0
        %862 = vmatprep.subr.mxu0 0.0
        %863 = vmatpush1.msra.mxu0 0.0
        %864 = vmatprep.subr.mxu0 0.0
        %865 = vmatpush1.msra.mxu0 0.0
        %866 = vmatprep.subr.mxu0 0.0
        %867 = vmatpush1.msra.mxu0 0.0
        %868 = vmatprep.subr.mxu0 0.0
        %869 = vmatpush1.msra.mxu0 0.0
        %870 = vmatprep.subr.mxu0 0.0
        %871 = vmatpush1.msra.mxu0 0.0
        %872 = vmatprep.subr.mxu0 0.0
        %873 = vmatpush1.msra.mxu0 0.0
        %874 = vmatprep.mubr.f32.mxu0 0.0
        %v875 = vand.u32 %v191, 4294901760
        %v876 = vsub.f32 %v191, %v875
        %v877 = vand.u32 %v876, 4294901760
        %878 = vmatmul.mubr.f32.gmra.mrb[0].mxu0 %v877
        %v879 = vpop.f32.mrb[0].mxu0
        %v880 = vadd.f32 %v701, %v879
        %v881 = vpop.f32.mrb[0].mxu0
        %882 = vmatprep.mubr.f32.mxu0 0.0
        %v883 = vand.u32 %v194, 4294901760
        %v884 = vsub.f32 %v194, %v883
        %v885 = vand.u32 %v884, 4294901760
        %886 = vmatmul.mubr.f32.gmra.mrb[0].mxu0 %v885
        %v887 = vpop.f32.mrb[0].mxu0
        %v888 = vadd.f32 %v708, %v887
        %v889 = vpop.f32.mrb[0].mxu0
        %890 = vmatprep.mubr.f32.mxu0 0.0
        %v891 = vand.u32 %v197, 4294901760
        %v892 = vsub.f32 %v197, %v891
        %v893 = vand.u32 %v892, 4294901760
        %894 = vmatmul.mubr.f32.gmra.mrb[0].mxu0 %v893
        %v895 = vpop.f32.mrb[0].mxu0
        %v896 = vadd.f32 %v715, %v895
        %v897 = vpop.f32.mrb[0].mxu0
        %898 = vmatprep.mubr.f32.mxu0 0.0
        %v899 = vand.u32 %v200, 4294901760
        %v900 = vsub.f32 %v200, %v899
        %v901 = vand.u32 %v900, 4294901760
        %902 = vmatmul.mubr.f32.gmra.mrb[0].mxu0 %v901
        %v903 = vpop.f32.mrb[0].mxu0
        %v904 = vadd.f32 %v722, %v903
        %v905 = vpop.f32.mrb[0].mxu0
        %906 = vmatprep.mubr.f32.mxu0 0.0
        %v907 = vand.u32 %v203, 4294901760
        %v908 = vsub.f32 %v203, %v907
        %v909 = vand.u32 %v908, 4294901760
        %910 = vmatmul.mubr.f32.gmra.mrb[0].mxu0 %v909
        %v911 = vpop.f32.mrb[0].mxu0
        %v912 = vadd.f32 %v729, %v911
        %v913 = vpop.f32.mrb[0].mxu0
        %914 = vmatprep.mubr.f32.mxu0 0.0
        %v915 = vand.u32 %v206, 4294901760
        %v916 = vsub.f32 %v206, %v915
        %v917 = vand.u32 %v916, 4294901760
        %918 = vmatmul.mubr.f32.gmra.mrb[0].mxu0 %v917
        %v919 = vpop.f32.mrb[0].mxu0
        %v920 = vadd.f32 %v736, %v919
        %v921 = vpop.f32.mrb[0].mxu0
        %922 = vmatprep.mubr.f32.mxu0 0.0
        %v923 = vand.u32 %v209, 4294901760
        %v924 = vsub.f32 %v209, %v923
        %v925 = vand.u32 %v924, 4294901760
        %926 = vmatmul.mubr.f32.gmra.mrb[0].mxu0 %v925
        %v927 = vpop.f32.mrb[0].mxu0
        %v928 = vadd.f32 %v743, %v927
        %v929 = vpop.f32.mrb[0].mxu0
        %930 = vmatprep.mubr.f32.mxu0 0.0
        %v931 = vand.u32 %v212, 4294901760
        %v932 = vsub.f32 %v212, %v931
        %v933 = vand.u32 %v932, 4294901760
        %934 = vmatmul.mubr.f32.gmra.mrb[0].mxu0 %v933
        %v935 = vpop.f32.mrb[0].mxu0
        %v936 = vadd.f32 %v750, %v935
        %v937 = vpop.f32.mrb[0].mxu0
        %938 = vmatprep.mubr.f32.mxu0 0.0
        %v939 = vand.u32 %v215, 4294901760
        %v940 = vsub.f32 %v215, %v939
        %v941 = vand.u32 %v940, 4294901760
        %942 = vmatmul.mubr.f32.gmra.mrb[0].mxu0 %v941
        %v943 = vpop.f32.mrb[0].mxu0
        %v944 = vadd.f32 %v757, %v943
        %v945 = vpop.f32.mrb[0].mxu0
        %946 = vmatprep.mubr.f32.mxu0 0.0
        %v947 = vand.u32 %v218, 4294901760
        %v948 = vsub.f32 %v218, %v947
        %v949 = vand.u32 %v948, 4294901760
        %950 = vmatmul.mubr.f32.gmra.mrb[0].mxu0 %v949
        %v951 = vpop.f32.mrb[0].mxu0
        %v952 = vadd.f32 %v764, %v951
        %v953 = vpop.f32.mrb[0].mxu0
        %954 = vmatprep.mubr.f32.mxu0 0.0
        %v955 = vand.u32 %v221, 4294901760
        %v956 = vsub.f32 %v221, %v955
        %v957 = vand.u32 %v956, 4294901760
        %958 = vmatmul.mubr.f32.gmra.mrb[0].mxu0 %v957
        %v959 = vpop.f32.mrb[0].mxu0
        %v960 = vadd.f32 %v771, %v959
        %v961 = vpop.f32.mrb[0].mxu0
        %962 = vmatprep.mubr.f32.mxu0 0.0
        %v963 = vand.u32 %v224, 4294901760
        %v964 = vsub.f32 %v224, %v963
        %v965 = vand.u32 %v964, 4294901760
        %966 = vmatmul.mubr.f32.gmra.mrb[0].mxu0 %v965
        %v967 = vpop.f32.mrb[0].mxu0
        %v968 = vadd.f32 %v778, %v967
        %v969 = vpop.f32.mrb[0].mxu0
        %970 = vmatprep.mubr.f32.mxu0 0.0
        %v971 = vand.u32 %v227, 4294901760
        %v972 = vsub.f32 %v227, %v971
        %v973 = vand.u32 %v972, 4294901760
        %974 = vmatmul.mubr.f32.gmra.mrb[0].mxu0 %v973
        %v975 = vpop.f32.mrb[0].mxu0
        %v976 = vadd.f32 %v785, %v975
        %v977 = vpop.f32.mrb[0].mxu0
        %978 = vmatprep.mubr.f32.mxu0 0.0
        %v979 = vand.u32 %v230, 4294901760
        %v980 = vsub.f32 %v230, %v979
        %v981 = vand.u32 %v980, 4294901760
        %982 = vmatmul.mubr.f32.gmra.mrb[0].mxu0 %v981
        %v983 = vpop.f32.mrb[0].mxu0
        %v984 = vadd.f32 %v792, %v983
        %v985 = vpop.f32.mrb[0].mxu0
        %986 = vmatprep.mubr.f32.mxu0 0.0
        %v987 = vand.u32 %v233, 4294901760
        %v988 = vsub.f32 %v233, %v987
        %v989 = vand.u32 %v988, 4294901760
        %990 = vmatmul.mubr.f32.gmra.mrb[0].mxu0 %v989
        %v991 = vpop.f32.mrb[0].mxu0
        %v992 = vadd.f32 %v799, %v991
        %v993 = vpop.f32.mrb[0].mxu0
        %994 = vmatprep.mubr.f32.mxu0 0.0
        %v995 = vand.u32 %v236, 4294901760
        %v996 = vsub.f32 %v236, %v995
        %v997 = vand.u32 %v996, 4294901760
        %998 = vmatmul.mubr.f32.gmra.mrb[0].mxu0 %v997
        %v999 = vpop.f32.mrb[0].mxu0
        %v1000 = vadd.f32 %v806, %v999
        %v1001 = vpop.f32.mrb[0].mxu0
        %1002 = vdwg.mxu0
        %1003 = vmatprep.subr.mxu0 0.0
        %v1004 = vand.u32 %v188, 4294901760
        %v1005 = vsub.f32 %v188, %v1004
        %v1006 = vand.u32 %v1005, 4294901760
        %1007 = vmatpush1.msra.mxu0 %v1006
        %1008 = vmatprep.subr.mxu0 0.0
        %1009 = vmatpush1.msra.mxu0 0.0
        %1010 = vmatprep.subr.mxu0 0.0
        %1011 = vmatpush1.msra.mxu0 0.0
        %1012 = vmatprep.subr.mxu0 0.0
        %1013 = vmatpush1.msra.mxu0 0.0
        %1014 = vmatprep.subr.mxu0 0.0
        %1015 = vmatpush1.msra.mxu0 0.0
        %1016 = vmatprep.subr.mxu0 0.0
        %1017 = vmatpush1.msra.mxu0 0.0
        %1018 = vmatprep.subr.mxu0 0.0
        %1019 = vmatpush1.msra.mxu0 0.0
        %1020 = vmatprep.subr.mxu0 0.0
        %1021 = vmatpush1.msra.mxu0 0.0
        %1022 = vmatprep.subr.mxu0 0.0
        %1023 = vmatpush1.msra.mxu0 0.0
        %1024 = vmatprep.subr.mxu0 0.0
        %1025 = vmatpush1.msra.mxu0 0.0
        %1026 = vmatprep.subr.mxu0 0.0
        %1027 = vmatpush1.msra.mxu0 0.0
        %1028 = vmatprep.subr.mxu0 0.0
        %1029 = vmatpush1.msra.mxu0 0.0
        %1030 = vmatprep.subr.mxu0 0.0
        %1031 = vmatpush1.msra.mxu0 0.0
        %1032 = vmatprep.subr.mxu0 0.0
        %1033 = vmatpush1.msra.mxu0 0.0
        %1034 = vmatprep.subr.mxu0 0.0
        %1035 = vmatpush1.msra.mxu0 0.0
        %1036 = vmatprep.subr.mxu0 0.0
        %1037 = vmatpush1.msra.mxu0 0.0
        %1038 = vmatprep.subr.mxu0 0.0
        %1039 = vmatpush1.msra.mxu0 0.0
        %1040 = vmatprep.subr.mxu0 0.0
        %1041 = vmatpush1.msra.mxu0 0.0
        %1042 = vmatprep.subr.mxu0 0.0
        %1043 = vmatpush1.msra.mxu0 0.0
        %1044 = vmatprep.subr.mxu0 0.0
        %1045 = vmatpush1.msra.mxu0 0.0
        %1046 = vmatprep.subr.mxu0 0.0
        %1047 = vmatpush1.msra.mxu0 0.0
        %1048 = vmatprep.subr.mxu0 0.0
        %1049 = vmatpush1.msra.mxu0 0.0
        %1050 = vmatprep.subr.mxu0 0.0
        %1051 = vmatpush1.msra.mxu0 0.0
        %1052 = vmatprep.subr.mxu0 0.0
        %1053 = vmatpush1.msra.mxu0 0.0
        %1054 = vmatprep.subr.mxu0 0.0
        %1055 = vmatpush1.msra.mxu0 0.0
        %1056 = vmatprep.subr.mxu0 0.0
        %1057 = vmatpush1.msra.mxu0 0.0
        %1058 = vmatprep.subr.mxu0 0.0
        %1059 = vmatpush1.msra.mxu0 0.0
        %1060 = vmatprep.subr.mxu0 0.0
        %1061 = vmatpush1.msra.mxu0 0.0
        %1062 = vmatprep.subr.mxu0 0.0
        %1063 = vmatpush1.msra.mxu0 0.0
        %1064 = vmatprep.subr.mxu0 0.0
        %1065 = vmatpush1.msra.mxu0 0.0
        %1066 = vmatprep.subr.mxu0 0.0
        %1067 = vmatpush1.msra.mxu0 0.0
        %1068 = vmatprep.subr.mxu0 0.0
        %1069 = vmatpush1.msra.mxu0 0.0
        %1070 = vmatprep.mubr.f32.mxu0 0.0
        %v1071 = vand.u32 %v191, 4294901760
        %1072 = vmatmul.mubr.f32.gmra.mrb[0].mxu0 %v1071
        %v1073 = vpop.f32.mrb[0].mxu0
        %v1074 = vadd.f32 %v880, %v1073
        %v1075 = vpop.f32.mrb[0].mxu0
        %1076 = vmatprep.mubr.f32.mxu0 0.0
        %v1077 = vand.u32 %v194, 4294901760
        %1078 = vmatmul.mubr.f32.gmra.mrb[0].mxu0 %v1077
        %v1079 = vpop.f32.mrb[0].mxu0
        %v1080 = vadd.f32 %v888, %v1079
        %v1081 = vpop.f32.mrb[0].mxu0
        %1082 = vmatprep.mubr.f32.mxu0 0.0
        %v1083 = vand.u32 %v197, 4294901760
        %1084 = vmatmul.mubr.f32.gmra.mrb[0].mxu0 %v1083
        %v1085 = vpop.f32.mrb[0].mxu0
        %v1086 = vadd.f32 %v896, %v1085
        %v1087 = vpop.f32.mrb[0].mxu0
        %1088 = vmatprep.mubr.f32.mxu0 0.0
        %v1089 = vand.u32 %v200, 4294901760
        %1090 = vmatmul.mubr.f32.gmra.mrb[0].mxu0 %v1089
        %v1091 = vpop.f32.mrb[0].mxu0
        %v1092 = vadd.f32 %v904, %v1091
        %v1093 = vpop.f32.mrb[0].mxu0
        %1094 = vmatprep.mubr.f32.mxu0 0.0
        %v1095 = vand.u32 %v203, 4294901760
        %1096 = vmatmul.mubr.f32.gmra.mrb[0].mxu0 %v1095
        %v1097 = vpop.f32.mrb[0].mxu0
        %v1098 = vadd.f32 %v912, %v1097
        %v1099 = vpop.f32.mrb[0].mxu0
        %1100 = vmatprep.mubr.f32.mxu0 0.0
        %v1101 = vand.u32 %v206, 4294901760
        %1102 = vmatmul.mubr.f32.gmra.mrb[0].mxu0 %v1101
        %v1103 = vpop.f32.mrb[0].mxu0
        %v1104 = vadd.f32 %v920, %v1103
        %v1105 = vpop.f32.mrb[0].mxu0
        %1106 = vmatprep.mubr.f32.mxu0 0.0
        %v1107 = vand.u32 %v209, 4294901760
        %1108 = vmatmul.mubr.f32.gmra.mrb[0].mxu0 %v1107
        %v1109 = vpop.f32.mrb[0].mxu0
        %v1110 = vadd.f32 %v928, %v1109
        %v1111 = vpop.f32.mrb[0].mxu0
        %1112 = vmatprep.mubr.f32.mxu0 0.0
        %v1113 = vand.u32 %v212, 4294901760
        %1114 = vmatmul.mubr.f32.gmra.mrb[0].mxu0 %v1113
        %v1115 = vpop.f32.mrb[0].mxu0
        %v1116 = vadd.f32 %v936, %v1115
        %v1117 = vpop.f32.mrb[0].mxu0
        %1118 = vmatprep.mubr.f32.mxu0 0.0
        %v1119 = vand.u32 %v215, 4294901760
        %1120 = vmatmul.mubr.f32.gmra.mrb[0].mxu0 %v1119
        %v1121 = vpop.f32.mrb[0].mxu0
        %v1122 = vadd.f32 %v944, %v1121
        %v1123 = vpop.f32.mrb[0].mxu0
        %1124 = vmatprep.mubr.f32.mxu0 0.0
        %v1125 = vand.u32 %v218, 4294901760
        %1126 = vmatmul.mubr.f32.gmra.mrb[0].mxu0 %v1125
        %v1127 = vpop.f32.mrb[0].mxu0
        %v1128 = vadd.f32 %v952, %v1127
        %v1129 = vpop.f32.mrb[0].mxu0
        %1130 = vmatprep.mubr.f32.mxu0 0.0
        %v1131 = vand.u32 %v221, 4294901760
        %1132 = vmatmul.mubr.f32.gmra.mrb[0].mxu0 %v1131
        %v1133 = vpop.f32.mrb[0].mxu0
        %v1134 = vadd.f32 %v960, %v1133
        %v1135 = vpop.f32.mrb[0].mxu0
        %1136 = vmatprep.mubr.f32.mxu0 0.0
        %v1137 = vand.u32 %v224, 4294901760
        %1138 = vmatmul.mubr.f32.gmra.mrb[0].mxu0 %v1137
        %v1139 = vpop.f32.mrb[0].mxu0
        %v1140 = vadd.f32 %v968, %v1139
        %v1141 = vpop.f32.mrb[0].mxu0
        %1142 = vmatprep.mubr.f32.mxu0 0.0
        %v1143 = vand.u32 %v227, 4294901760
        %1144 = vmatmul.mubr.f32.gmra.mrb[0].mxu0 %v1143
        %v1145 = vpop.f32.mrb[0].mxu0
        %v1146 = vadd.f32 %v976, %v1145
        %v1147 = vpop.f32.mrb[0].mxu0
        %1148 = vmatprep.mubr.f32.mxu0 0.0
        %v1149 = vand.u32 %v230, 4294901760
        %1150 = vmatmul.mubr.f32.gmra.mrb[0].mxu0 %v1149
        %v1151 = vpop.f32.mrb[0].mxu0
        %v1152 = vadd.f32 %v984, %v1151
        %v1153 = vpop.f32.mrb[0].mxu0
        %1154 = vmatprep.mubr.f32.mxu0 0.0
        %v1155 = vand.u32 %v233, 4294901760
        %1156 = vmatmul.mubr.f32.gmra.mrb[0].mxu0 %v1155
        %v1157 = vpop.f32.mrb[0].mxu0
        %v1158 = vadd.f32 %v992, %v1157
        %v1159 = vpop.f32.mrb[0].mxu0
        %1160 = vmatprep.mubr.f32.mxu0 0.0
        %v1161 = vand.u32 %v236, 4294901760
        %1162 = vmatmul.mubr.f32.gmra.mrb[0].mxu0 %v1161
        %v1163 = vpop.f32.mrb[0].mxu0
        %v1164 = vadd.f32 %v1000, %v1163
        %v1165 = vpop.f32.mrb[0].mxu0
        %1166 = vdwg.mxu0
        %1167 = vmatprep.subr.mxu0 0.0
        %v1168 = vand.u32 %v188, 4294901760
        %1169 = vmatpush1.msra.mxu0 %v1168
        %1170 = vmatprep.subr.mxu0 0.0
        %1171 = vmatpush1.msra.mxu0 0.0
        %1172 = vmatprep.subr.mxu0 0.0
        %1173 = vmatpush1.msra.mxu0 0.0
        %1174 = vmatprep.subr.mxu0 0.0
        %1175 = vmatpush1.msra.mxu0 0.0
        %1176 = vmatprep.subr.mxu0 0.0
        %1177 = vmatpush1.msra.mxu0 0.0
        %1178 = vmatprep.subr.mxu0 0.0
        %1179 = vmatpush1.msra.mxu0 0.0
        %1180 = vmatprep.subr.mxu0 0.0
        %1181 = vmatpush1.msra.mxu0 0.0
        %1182 = vmatprep.subr.mxu0 0.0
        %1183 = vmatpush1.msra.mxu0 0.0
        %1184 = vmatprep.subr.mxu0 0.0
        %1185 = vmatpush1.msra.mxu0 0.0
        %1186 = vmatprep.subr.mxu0 0.0
        %1187 = vmatpush1.msra.mxu0 0.0
        %1188 = vmatprep.subr.mxu0 0.0
        %1189 = vmatpush1.msra.mxu0 0.0
        %1190 = vmatprep.subr.mxu0 0.0
        %1191 = vmatpush1.msra.mxu0 0.0
        %1192 = vmatprep.subr.mxu0 0.0
        %1193 = vmatpush1.msra.mxu0 0.0
        %1194 = vmatprep.subr.mxu0 0.0
        %1195 = vmatpush1.msra.mxu0 0.0
        %1196 = vmatprep.subr.mxu0 0.0
        %1197 = vmatpush1.msra.mxu0 0.0
        %1198 = vmatprep.subr.mxu0 0.0
        %1199 = vmatpush1.msra.mxu0 0.0
        %1200 = vmatprep.subr.mxu0 0.0
        %1201 = vmatpush1.msra.mxu0 0.0
        %1202 = vmatprep.subr.mxu0 0.0
        %1203 = vmatpush1.msra.mxu0 0.0
        %1204 = vmatprep.subr.mxu0 0.0
        %1205 = vmatpush1.msra.mxu0 0.0
        %1206 = vmatprep.subr.mxu0 0.0
        %1207 = vmatpush1.msra.mxu0 0.0
        %1208 = vmatprep.subr.mxu0 0.0
        %1209 = vmatpush1.msra.mxu0 0.0
        %1210 = vmatprep.subr.mxu0 0.0
        %1211 = vmatpush1.msra.mxu0 0.0
        %1212 = vmatprep.subr.mxu0 0.0
        %1213 = vmatpush1.msra.mxu0 0.0
        %1214 = vmatprep.subr.mxu0 0.0
        %1215 = vmatpush1.msra.mxu0 0.0
        %1216 = vmatprep.subr.mxu0 0.0
        %1217 = vmatpush1.msra.mxu0 0.0
        %1218 = vmatprep.subr.mxu0 0.0
        %1219 = vmatpush1.msra.mxu0 0.0
        %1220 = vmatprep.subr.mxu0 0.0
        %1221 = vmatpush1.msra.mxu0 0.0
        %1222 = vmatprep.subr.mxu0 0.0
        %1223 = vmatpush1.msra.mxu0 0.0
        %1224 = vmatprep.subr.mxu0 0.0
        %1225 = vmatpush1.msra.mxu0 0.0
        %1226 = vmatprep.subr.mxu0 0.0
        %1227 = vmatpush1.msra.mxu0 0.0
        %1228 = vmatprep.subr.mxu0 0.0
        %1229 = vmatpush1.msra.mxu0 0.0
        %1230 = vmatprep.subr.mxu0 0.0
        %1231 = vmatpush1.msra.mxu0 0.0
        %1232 = vmatprep.mubr.f32.mxu0 0.0
        %v1233 = vand.u32 %v191, 4294901760
        %1234 = vmatmul.mubr.f32.gmra.mrb[0].mxu0 %v1233
        %v1235 = vpop.f32.mrb[0].mxu0
        %v1236 = vadd.f32 %v1074, %v1235
        %v1237 = vpop.f32.mrb[0].mxu0
        %1238 = vmatprep.mubr.f32.mxu0 0.0
        %v1239 = vand.u32 %v194, 4294901760
        %1240 = vmatmul.mubr.f32.gmra.mrb[0].mxu0 %v1239
        %v1241 = vpop.f32.mrb[0].mxu0
        %v1242 = vadd.f32 %v1080, %v1241
        %v1243 = vpop.f32.mrb[0].mxu0
        %1244 = vmatprep.mubr.f32.mxu0 0.0
        %v1245 = vand.u32 %v197, 4294901760
        %1246 = vmatmul.mubr.f32.gmra.mrb[0].mxu0 %v1245
        %v1247 = vpop.f32.mrb[0].mxu0
        %v1248 = vadd.f32 %v1086, %v1247
        %v1249 = vpop.f32.mrb[0].mxu0
        %1250 = vmatprep.mubr.f32.mxu0 0.0
        %v1251 = vand.u32 %v200, 4294901760
        %1252 = vmatmul.mubr.f32.gmra.mrb[0].mxu0 %v1251
        %v1253 = vpop.f32.mrb[0].mxu0
        %v1254 = vadd.f32 %v1092, %v1253
        %v1255 = vpop.f32.mrb[0].mxu0
        %1256 = vmatprep.mubr.f32.mxu0 0.0
        %v1257 = vand.u32 %v203, 4294901760
        %1258 = vmatmul.mubr.f32.gmra.mrb[0].mxu0 %v1257
        %v1259 = vpop.f32.mrb[0].mxu0
        %v1260 = vadd.f32 %v1098, %v1259
        %v1261 = vpop.f32.mrb[0].mxu0
        %1262 = vmatprep.mubr.f32.mxu0 0.0
        %v1263 = vand.u32 %v206, 4294901760
        %1264 = vmatmul.mubr.f32.gmra.mrb[0].mxu0 %v1263
        %v1265 = vpop.f32.mrb[0].mxu0
        %v1266 = vadd.f32 %v1104, %v1265
        %v1267 = vpop.f32.mrb[0].mxu0
        %1268 = vmatprep.mubr.f32.mxu0 0.0
        %v1269 = vand.u32 %v209, 4294901760
        %1270 = vmatmul.mubr.f32.gmra.mrb[0].mxu0 %v1269
        %v1271 = vpop.f32.mrb[0].mxu0
        %v1272 = vadd.f32 %v1110, %v1271
        %v1273 = vpop.f32.mrb[0].mxu0
        %1274 = vmatprep.mubr.f32.mxu0 0.0
        %v1275 = vand.u32 %v212, 4294901760
        %1276 = vmatmul.mubr.f32.gmra.mrb[0].mxu0 %v1275
        %v1277 = vpop.f32.mrb[0].mxu0
        %v1278 = vadd.f32 %v1116, %v1277
        %v1279 = vpop.f32.mrb[0].mxu0
        %1280 = vmatprep.mubr.f32.mxu0 0.0
        %v1281 = vand.u32 %v215, 4294901760
        %1282 = vmatmul.mubr.f32.gmra.mrb[0].mxu0 %v1281
        %v1283 = vpop.f32.mrb[0].mxu0
        %v1284 = vadd.f32 %v1122, %v1283
        %v1285 = vpop.f32.mrb[0].mxu0
        %1286 = vmatprep.mubr.f32.mxu0 0.0
        %v1287 = vand.u32 %v218, 4294901760
        %1288 = vmatmul.mubr.f32.gmra.mrb[0].mxu0 %v1287
        %v1289 = vpop.f32.mrb[0].mxu0
        %v1290 = vadd.f32 %v1128, %v1289
        %v1291 = vpop.f32.mrb[0].mxu0
        %1292 = vmatprep.mubr.f32.mxu0 0.0
        %v1293 = vand.u32 %v221, 4294901760
        %1294 = vmatmul.mubr.f32.gmra.mrb[0].mxu0 %v1293
        %v1295 = vpop.f32.mrb[0].mxu0
        %v1296 = vadd.f32 %v1134, %v1295
        %v1297 = vpop.f32.mrb[0].mxu0
        %1298 = vmatprep.mubr.f32.mxu0 0.0
        %v1299 = vand.u32 %v224, 4294901760
        %1300 = vmatmul.mubr.f32.gmra.mrb[0].mxu0 %v1299
        %v1301 = vpop.f32.mrb[0].mxu0
        %v1302 = vadd.f32 %v1140, %v1301
        %v1303 = vpop.f32.mrb[0].mxu0
        %1304 = vmatprep.mubr.f32.mxu0 0.0
        %v1305 = vand.u32 %v227, 4294901760
        %1306 = vmatmul.mubr.f32.gmra.mrb[0].mxu0 %v1305
        %v1307 = vpop.f32.mrb[0].mxu0
        %v1308 = vadd.f32 %v1146, %v1307
        %v1309 = vpop.f32.mrb[0].mxu0
        %1310 = vmatprep.mubr.f32.mxu0 0.0
        %v1311 = vand.u32 %v230, 4294901760
        %1312 = vmatmul.mubr.f32.gmra.mrb[0].mxu0 %v1311
        %v1313 = vpop.f32.mrb[0].mxu0
        %v1314 = vadd.f32 %v1152, %v1313
        %v1315 = vpop.f32.mrb[0].mxu0
        %1316 = vmatprep.mubr.f32.mxu0 0.0
        %v1317 = vand.u32 %v233, 4294901760
        %1318 = vmatmul.mubr.f32.gmra.mrb[0].mxu0 %v1317
        %v1319 = vpop.f32.mrb[0].mxu0
        %v1320 = vadd.f32 %v1158, %v1319
        %v1321 = vpop.f32.mrb[0].mxu0
        %1322 = vmatprep.mubr.f32.mxu0 0.0
        %v1323 = vand.u32 %v236, 4294901760
        %1324 = vmatmul.mubr.f32.gmra.mrb[0].mxu0 %v1323
        %v1325 = vpop.f32.mrb[0].mxu0
        %v1326 = vadd.f32 %v1164, %v1325
        %v1327 = vpop.f32.mrb[0].mxu0
        %1328 = vdwg.mxu0
        %v1329 = vmul.f32 %v1236, %v1236
        %v1330 = vmul.f32 %v1242, %v1242
        %v1331 = vmul.f32 %v1248, %v1248
        %v1332 = vmul.f32 %v1254, %v1254
        %v1333 = vmul.f32 %v1260, %v1260
        %v1334 = vmul.f32 %v1266, %v1266
        %v1335 = vmul.f32 %v1272, %v1272
        %v1336 = vmul.f32 %v1278, %v1278
        %v1337 = vmul.f32 %v1284, %v1284
        %v1338 = vmul.f32 %v1290, %v1290
        %v1339 = vmul.f32 %v1296, %v1296
        %v1340 = vmul.f32 %v1302, %v1302
        %v1341 = vmul.f32 %v1308, %v1308
        %v1342 = vmul.f32 %v1314, %v1314
        %v1343 = vmul.f32 %v1320, %v1320
        %v1344 = vmul.f32 %v1326, %v1326
        %v1345 = vld [vmem:[%s2] sm:$0x1]
        %v1347 = vlaneseq
        %v1348 = vshrl.u32 %v1347, 7
        %v1349 = vsub.s32 0, %v1348
        %v1350 = vrot.slane %v1345, %v1349
        %v1352 = vmul.f32 %v1329, %v1350
        %v1353 = vmul.f32 %v1330, %v1350
        %v1354 = vmul.f32 %v1331, %v1350
        %v1355 = vmul.f32 %v1332, %v1350
        %v1356 = vmul.f32 %v1333, %v1350
        %v1357 = vmul.f32 %v1334, %v1350
        %v1358 = vmul.f32 %v1335, %v1350
        %v1359 = vmul.f32 %v1336, %v1350
        %v1360 = vmul.f32 %v1337, %v1350
        %v1361 = vmul.f32 %v1338, %v1350
        %v1362 = vmul.f32 %v1339, %v1350
        %v1363 = vmul.f32 %v1340, %v1350
        %v1364 = vmul.f32 %v1341, %v1350
        %v1365 = vmul.f32 %v1342, %v1350
        %v1366 = vmul.f32 %v1343, %v1350
        %v1367 = vmul.f32 %v1344, %v1350
        %v1368 = vmul.f32 %v1352, 1.442695
        %v1369 = vpow.pop %v1368
        %v1370 = vmul.f32 %v1353, 1.442695
        %v1371 = vpow.pop %v1370
        %v1372 = vmul.f32 %v1354, 1.442695
        %v1373 = vpow.pop %v1372
        %v1374 = vmul.f32 %v1355, 1.442695
        %v1375 = vpow.pop %v1374
        %v1376 = vmul.f32 %v1356, 1.442695
        %v1377 = vpow.pop %v1376
        %v1378 = vmul.f32 %v1357, 1.442695
        %v1379 = vpow.pop %v1378
        %v1380 = vmul.f32 %v1358, 1.442695
        %v1381 = vpow.pop %v1380
        %v1382 = vmul.f32 %v1359, 1.442695
        %v1383 = vpow.pop %v1382
        %v1384 = vmul.f32 %v1360, 1.442695
        %v1385 = vpow.pop %v1384
        %v1386 = vmul.f32 %v1361, 1.442695
        %v1387 = vpow.pop %v1386
        %v1388 = vmul.f32 %v1362, 1.442695
        %v1389 = vpow.pop %v1388
        %v1390 = vmul.f32 %v1363, 1.442695
        %v1391 = vpow.pop %v1390
        %v1392 = vmul.f32 %v1364, 1.442695
        %v1393 = vpow.pop %v1392
        %v1394 = vmul.f32 %v1365, 1.442695
        %v1395 = vpow.pop %v1394
        %v1396 = vmul.f32 %v1366, 1.442695
        %v1397 = vpow.pop %v1396
        %v1398 = vmul.f32 %v1367, 1.442695
        %v1399 = vpow.pop %v1398
        %1400 = vst [vmem:[%s164] sm:$0xff] %v1369
        %1401 = vst [vmem:[%s164 + $0x8] sm:$0xff] %v1371
        %1402 = vst [vmem:[%s164 + $0x10] sm:$0xff] %v1373
        %1403 = vst [vmem:[%s164 + $0x18] sm:$0xff] %v1375
        %1404 = vst [vmem:[%s164 + $0x20] sm:$0xff] %v1377
        %1405 = vst [vmem:[%s164 + $0x28] sm:$0xff] %v1379
        %1406 = vst [vmem:[%s164 + $0x30] sm:$0xff] %v1381
        %1407 = vst [vmem:[%s164 + $0x38] sm:$0xff] %v1383
        %1408 = vst [vmem:[%s164 + $0x40] sm:$0xff] %v1385
        %1409 = vst [vmem:[%s164 + $0x48] sm:$0xff] %v1387
        %1410 = vst [vmem:[%s164 + $0x50] sm:$0xff] %v1389
        %1411 = vst [vmem:[%s164 + $0x58] sm:$0xff] %v1391
        %1412 = vst [vmem:[%s164 + $0x60] sm:$0xff] %v1393
        %1413 = vst [vmem:[%s164 + $0x68] sm:$0xff] %v1395
        %1414 = vst [vmem:[%s164 + $0x70] sm:$0xff] %v1397
        %1415 = vst [vmem:[%s164 + $0x78] sm:$0xff] %v1399
        %s1416 = sand.u32 %s93, 1
        %s1417 = scalar_lea.sflag [#allocation3], %s1416
        %s1418 = sand.u32 %s93, 1
        %s1419 = smul.addr %s1418, 128
        %s1420 = scalar_lea.vmem [#allocation2], %s1419
        // Predicated region
        $region33: #{tpu_custom_call.1} parent=31 // pred_check
          %p1421 = pneg %p103
        $region34: #{tpu_custom_call.1} parent=31 // pred_check_branch
          %1423 = sbr.rel (%p1421) target = $region36
        $region35: #{tpu_custom_call.1} parent=31 // pred_region
          %s1424 = smul.u32 16, %s17
          %s1426 = ssub.s32 2048, 2048
          %1427 = vsyncadd %s1417, %s1426
          %s1428 = smul.addr %s1424, 128
          %s1429 = scalar_lea.hbm %s3, %s1428
          %s1430 = sshll.u32 %s1420, 4
          %s1431 = int_to_ptr.vmem [resolvable:$true] %s1430
          %1436 = dma.vmem_to_hbm [thread:$0]  %s1431, 2048, %s1429, %s1417, 128, 128, 8
        $region36: #{tpu_custom_call.1} parent=31 // pred_fallthru
          _
      $region32: #{tpu_custom_call.1} parent=5 // pred_fallthru
        _
      %p1437 = scmp.le.s32.totalorder 2, %s12
      // Predicated region
      $region37: #{tpu_custom_call.1} parent=5 // pred_check
        %p1438 = pneg %p1437
      $region38: #{tpu_custom_call.1} parent=5 // pred_check_branch
        %1440 = sbr.rel (%p1438) target = $region40
      $region39: #{tpu_custom_call.1} parent=5 // pred_region
        %s1441 = ssub.s32 %s12, 2
        // Predicated region
        $region41: #{tpu_custom_call.1} parent=39 // pred_check
          %p1442 = pneg %p109
        $region42: #{tpu_custom_call.1} parent=39 // pred_check_branch
          %1444 = sbr.rel (%p1442) target = $region44
        $region43: #{tpu_custom_call.1} parent=39 // pred_region
          %s1445 = sand.u32 %s94, 1
          %s1446 = scalar_lea.sflag [#allocation3], %s1445
          %s1447 = sand.u32 %s94, 1
          %s1448 = smul.addr %s1447, 128
          %s1449 = scalar_lea.vmem [#allocation2], %s1448
          %1450 = dma.done %s1446, 2048
        $region44: #{tpu_custom_call.1} parent=39 // pred_fallthru
          _
      $region40: #{tpu_custom_call.1} parent=5 // pred_fallthru
        _
    $region6: #{tpu_custom_call.1} parent=1 // loop_footer
      %s16 = sadd.s32 1, %s12
    $region7: #{tpu_custom_call.1} parent=1 // loop_footer_branch
      %11 = sbr.rel target = $region3
    $region8: #{tpu_custom_call.1} parent=1 // loop_exit
      _
    %1451 = vsyncpa [#allocation3], 1
    %s1452 = scalar_lea.sflag [#allocation3], 1
    %1453 = vsyncpa %s1452, 1

</llo_original>
